<compile_context>
chip_gen: v7x
topology: tpu7x:2x2x1
jax: 0.10.0
libtpu: 0.0.40
codegen_flags: <defaults>
</compile_context>

<pallas_src>
import math

import jax
import jax.numpy as jnp
from jax.experimental import pallas as pl
from jax.experimental.pallas import tpu as pltpu


def _round_up(x, m):
    return ((x + m - 1) // m) * m


def _make_kernel(pos_weight, tile_rows, tiles_per_core, total_rows,
                 needs_mask, acc_rows):
    pos_weight = float(pos_weight)

    def kernel(mel_out_ref, mel_post_ref, mel_tgt_ref,
               gate_out_ref, gate_tgt_ref,
               mel_sum_ref, gate_sum_ref, acc_ref):
        c = pl.program_id(0)            # core / range split ("parallel")
        i = pl.program_id(1)            # tile step within the range ("arbitrary")
        nsteps = pl.num_programs(1)

        # --- mel squared errors for this tile (elementwise, VPU only) -------
        tgt = mel_tgt_ref[...].astype(jnp.float32)
        d1 = mel_out_ref[...].astype(jnp.float32) - tgt
        d2 = mel_post_ref[...].astype(jnp.float32) - tgt
        sq = d1 * d1 + d2 * d2                              # (tile_rows, T)

        if needs_mask:
            # Mask rows beyond the true extent (edge tile / fully-OOB tile of
            # the second core).  Padded block contents never reach the sum.
            row0 = (c * tiles_per_core + i) * tile_rows
            rows = jax.lax.broadcasted_iota(jnp.int32, sq.shape, 0)
            sq = jnp.where(row0 + rows < total_rows, sq, 0.0)

        # Partial-reduce the row axis down to a vreg-height slab (pure VALU;
        # keeps the accumulator tiny so VMEM goes to streamed tiles instead).
        if acc_rows == tile_rows:
            psum = sq
        else:
            psum = sq.reshape(tile_rows // acc_rows, acc_rows,
                              sq.shape[-1]).sum(axis=0)

        @pl.when(i == 0)
        def _():
            acc_ref[...] = psum          # assign on step 0 (no zero-fill pass)

        @pl.when(i > 0)
        def _():
            acc_ref[...] += psum

        @pl.when(i == nsteps - 1)
        def _():
            # single cross-lane/sublane collapse, once per core
            mel_sum = jnp.sum(acc_ref[...])

            # --- gate BCEWithLogitsLoss(pos_weight) --------------------------
            # gate blocks use a constant index_map -> DMA'd once, resident.
            x = gate_out_ref[...].astype(jnp.float32)       # logits
            t = gate_tgt_ref[...].astype(jnp.float32)       # targets
            # numerically stable softplus(x) = max(x, 0) + log1p(exp(-|x|))
            sp_pos = jnp.maximum(x, 0.0) + jnp.log1p(jnp.exp(-jnp.abs(x)))
            sp_neg = sp_pos - x                             # softplus(-x)
            gate_sum = jnp.sum(pos_weight * t * sp_neg + (1.0 - t) * sp_pos)

            # lane-dense per-core partial outputs (combined in the wrapper)
            mel_sum_ref[...] = jnp.full(mel_sum_ref.shape, mel_sum, jnp.float32)
            gate_sum_ref[...] = jnp.full(gate_sum_ref.shape, gate_sum, jnp.float32)

    return kernel


def tacotron2_loss(model_output, targets, gate_positive_weight,
                   target_tile_bytes=4 << 20):
    """Mirrors Tacotron2Loss.forward. Returns (total_loss, gate_loss) scalars."""
    mel_out, mel_out_postnet, gate_out, _ = model_output
    mel_target, gate_target = targets[0], targets[1]
    # NOTE: output_lengths (targets[2]) is intentionally unused, matching the
    # PyTorch reference (padded frames contribute to the loss).

    assert mel_out.shape == mel_target.shape == mel_out_postnet.shape
    B, n_mel, T = mel_out.shape
    R = B * n_mel
    n_mel_elems = R * T

    if gate_out.ndim < 2:
        gate_out = gate_out.reshape(1, -1)
    gate_target = gate_target.reshape(gate_out.shape)
    n_gate_elems = int(gate_out.size)

    # Flatten (B, n_mel, T) -> (R, T): contiguous, free reshape.  Tiles are
    # chosen directly in bytes, decoupled from batch divisors.
    mo = mel_out.reshape(R, T)
    mp = mel_out_postnet.reshape(R, T)
    mt = mel_target.reshape(R, T)

    itemsize = mel_out.dtype.itemsize
    rows_fit = max(8, ((target_tile_bytes // max(T * itemsize, 1)) // 8) * 8)
    if rows_fit >= R:
        TR = R                       # single full-extent tile (any R allowed)
    else:
        TR = rows_fit                # multiple of 8
    total_tiles = pl.cdiv(R, TR)

    # Split the tile range across 2 TensorCores (v7x) when there is enough
    # work; on 1-TC chips the extra "parallel" axis just serializes.
    NC = 2 if total_tiles >= 4 else 1
    TPC = pl.cdiv(total_tiles, NC)               # tiles per core
    needs_mask = (NC * TPC * TR) != R
    last_tile = total_tiles - 1

    acc_rows = 8 if (TR % 8 == 0 and TR > 8) else TR

    mel_spec = pl.BlockSpec(
        (TR, T), lambda c, i: (jnp.minimum(c * TPC + i, last_tile), 0))
    gate_spec = pl.BlockSpec(gate_out.shape,
                             lambda c, i: (0,) * gate_out.ndim)
    part_spec = pl.BlockSpec((1, 8, 128), lambda c, i: (c, 0, 0))

    # VMEM budget: 3 streamed mel inputs (double buffered) + 2 resident gate
    # blocks (double buffered by default) + accumulator + tiny outputs.
    gate_itemsize = gate_out.dtype.itemsize
    gshape = gate_out.shape
    gate_vmem = (math.prod(gshape[:-2]) * _round_up(gshape[-2], 8)
                 * _round_up(gshape[-1], 128) * gate_itemsize)
    mel_tile_vmem = _round_up(TR, 8) * _round_up(T, 128) * itemsize
    acc_vmem = _round_up(acc_rows, 8) * _round_up(T, 128) * 4
    out_vmem = 2 * NC * 8 * 128 * 4
    footprint = 3 * 2 * mel_tile_vmem + 2 * 2 * gate_vmem + acc_vmem + out_vmem
    vmem_limit = int(max(footprint + (4 << 20), 32 << 20))

    kernel = _make_kernel(gate_positive_weight, TR, TPC, R, needs_mask, acc_rows)

    cost = pl.CostEstimate(
        flops=6 * n_mel_elems + 8 * n_gate_elems,
        transcendentals=2 * n_gate_elems,
        bytes_accessed=(3 * n_mel_elems * itemsize
                        + 2 * n_gate_elems * gate_itemsize))

    mel_part, gate_part = pl.pallas_call(
        kernel,
        out_shape=(jax.ShapeDtypeStruct((NC, 8, 128), jnp.float32),
                   jax.ShapeDtypeStruct((NC, 8, 128), jnp.float32)),
        grid=(NC, TPC),
        in_specs=[mel_spec, mel_spec, mel_spec, gate_spec, gate_spec],
        out_specs=(part_spec, part_spec),
        scratch_shapes=[pltpu.VMEM((acc_rows, T), jnp.float32)],
        compiler_params=pltpu.CompilerParams(
            dimension_semantics=("parallel", "arbitrary"),
            vmem_limit_bytes=vmem_limit),
        cost_estimate=cost,
    )(mo, mp, mt, gate_out, gate_target)

    # tiny final combine + normalization in the wrapper
    mel_loss = jnp.sum(mel_part[:, 0, 0]) * (1.0 / n_mel_elems)
    gate_loss = gate_part[0, 0, 0] * (1.0 / n_gate_elems)
    return mel_loss + gate_loss, gate_loss


def _reference_loss(model_output, targets, gate_positive_weight):
    """Pure-JAX reference matching PyTorch semantics (for sanity check)."""
    mel_out, mel_out_postnet, gate_out, _ = model_output
    mel_target, gate_target = targets[0], targets[1]
    mel_loss = jnp.mean((mel_out - mel_target) ** 2) + \
               jnp.mean((mel_out_postnet - mel_target) ** 2)
    x = jnp.reshape(gate_out, (-1, 1))
    t = jnp.reshape(gate_target, (-1, 1))
    pw = gate_positive_weight
    sp_pos = jax.nn.softplus(x)
    sp_neg = jax.nn.softplus(-x)
    gate_loss = jnp.mean(pw * t * sp_neg + (1.0 - t) * sp_pos)
    return mel_loss + gate_loss, gate_loss


def _make_inputs(key, B, n_mel, T):
    k1, k2, k3, k4, k5 = jax.random.split(key, 5)
    mel_out = jax.random.normal(k1, (B, n_mel, T), dtype=jnp.float32)
    mel_out_postnet = jax.random.normal(k2, (B, n_mel, T), dtype=jnp.float32)
    mel_target = jax.random.normal(k3, (B, n_mel, T), dtype=jnp.float32)
    gate_out = jax.random.normal(k4, (B, T), dtype=jnp.float32)
    gate_target = (jax.random.uniform(k5, (B, T)) > 0.5).astype(jnp.float32)
    output_lengths = jnp.full((B,), T, dtype=jnp.int32)
    model_output = (mel_out, mel_out_postnet, gate_out, None)
    targets = (mel_target, gate_target, output_lengths)
    return model_output, targets


if __name__ == "__main__":
    gate_positive_weight = 10.0  # hparams.gate_positive_weight (deterministic)
    key = jax.random.PRNGKey(0)
    k_a, k_b = jax.random.split(key)

    # Case 1: small module-consistent shapes, single-tile fast path.
    model_output, targets = _make_inputs(k_a, 2, 8, 16)
    total_loss, gate_loss = tacotron2_loss(model_output, targets,
                                           gate_positive_weight)
    jax.block_until_ready((total_loss, gate_loss))
    ref_total, ref_gate = _reference_loss(model_output, targets,
                                          gate_positive_weight)
    assert jnp.allclose(total_loss, ref_total, rtol=1e-5, atol=1e-5)
    assert jnp.allclose(gate_loss, ref_gate, rtol=1e-5, atol=1e-5)

    # Case 2: forces multi-tile cdiv grid, edge-row masking and the 2-way
    # "parallel" range split (byte-target shrunk just for the self-check).
    model_output2, targets2 = _make_inputs(k_b, 4, 10, 96)
    total2, gate2 = tacotron2_loss(model_output2, targets2,
                                   gate_positive_weight,
                                   target_tile_bytes=4096)
    jax.block_until_ready((total2, gate2))
    ref_total2, ref_gate2 = _reference_loss(model_output2, targets2,
                                            gate_positive_weight)
    assert jnp.allclose(total2, ref_total2, rtol=1e-5, atol=1e-5)
    assert jnp.allclose(gate2, ref_gate2, rtol=1e-5, atol=1e-5)

    print("KERNEL_OK")
</pallas_src>

<mosaic_0001>
module attributes {stable_mosaic.version = 11 : i64} {
  func.func @kernel(%arg0: i32, %arg1: i32, %arg2: memref<16x16xf32, #tpu.memory_space<vmem>>, %arg3: memref<16x16xf32, #tpu.memory_space<vmem>>, %arg4: memref<16x16xf32, #tpu.memory_space<vmem>>, %arg5: memref<2x16xf32, #tpu.memory_space<vmem>>, %arg6: memref<2x16xf32, #tpu.memory_space<vmem>>, %arg7: memref<1x8x128xf32, #tpu.memory_space<vmem>>, %arg8: memref<1x8x128xf32, #tpu.memory_space<vmem>>, %arg9: memref<8x16xf32, #tpu.memory_space<vmem>>) attributes {dimension_semantics = [#tpu.dimension_semantics<parallel>, #tpu.dimension_semantics<arbitrary>], iteration_bounds = array<i64: 1, 1>, scalar_prefetch = 0 : i64, scratch_operands = 1 : i64, tpu.core_type = #tpu.core_type<tc>, window_params = [{transform_indices = @transform_0, window_bounds = array<i64: 16, 16>}, {transform_indices = @transform_1, window_bounds = array<i64: 16, 16>}, {transform_indices = @transform_2, window_bounds = array<i64: 16, 16>}, {pipeline_mode = #tpu.pipeline_mode<synchronous>, transform_indices = @transform_3, window_bounds = array<i64: 2, 16>}, {pipeline_mode = #tpu.pipeline_mode<synchronous>, transform_indices = @transform_4, window_bounds = array<i64: 2, 16>}, {transform_indices = @transform_5, window_bounds = array<i64: 1, 8, 128>}, {transform_indices = @transform_6, window_bounds = array<i64: 1, 8, 128>}]} {
    %c0 = arith.constant 0 : index
    %c0_0 = arith.constant 0 : index
    %0 = vector.load %arg4[%c0, %c0_0] : memref<16x16xf32, #tpu.memory_space<vmem>>, vector<16x16xf32>
    %c0_1 = arith.constant 0 : index
    %c0_2 = arith.constant 0 : index
    %1 = vector.load %arg2[%c0_1, %c0_2] : memref<16x16xf32, #tpu.memory_space<vmem>>, vector<16x16xf32>
    %2 = arith.subf %1, %0 : vector<16x16xf32>
    %c0_3 = arith.constant 0 : index
    %c0_4 = arith.constant 0 : index
    %3 = vector.load %arg3[%c0_3, %c0_4] : memref<16x16xf32, #tpu.memory_space<vmem>>, vector<16x16xf32>
    %4 = arith.subf %3, %0 : vector<16x16xf32>
    %5 = arith.mulf %2, %2 : vector<16x16xf32>
    %6 = arith.mulf %4, %4 : vector<16x16xf32>
    %7 = arith.addf %5, %6 : vector<16x16xf32>
    %8 = vector.shape_cast %7 : vector<16x16xf32> to vector<2x8x16xf32>
    %cst = arith.constant dense<0.000000e+00> : vector<8x16xf32>
    %9 = vector.multi_reduction <add>, %8, %cst [0] : vector<2x8x16xf32> to vector<8x16xf32>
    %c0_i32 = arith.constant 0 : i32
    %10 = arith.cmpi eq, %arg1, %c0_i32 : i32
    %11 = arith.extui %10 : i1 to i32
    %c0_i32_5 = arith.constant 0 : i32
    %12 = arith.cmpi ne, %11, %c0_i32_5 : i32
    scf.if %12 {
      %c0_10 = arith.constant 0 : index
      %c0_11 = arith.constant 0 : index
      %19 = vector.load %arg9[%c0_10, %c0_11] : memref<8x16xf32, #tpu.memory_space<vmem>>, vector<8x16xf32>
      tpu.vector_store %arg9[%c0_10, %c0_11], %9 {strides = array<i32>} : memref<8x16xf32, #tpu.memory_space<vmem>>, vector<8x16xf32>,
    } else {
    }
    %c0_i32_6 = arith.constant 0 : i32
    %13 = arith.cmpi sgt, %arg1, %c0_i32_6 : i32
    %14 = arith.extui %13 : i1 to i32
    %c0_i32_7 = arith.constant 0 : i32
    %15 = arith.cmpi ne, %14, %c0_i32_7 : i32
    scf.if %15 {
      %c0_10 = arith.constant 0 : index
      %c0_11 = arith.constant 0 : index
      %19 = vector.load %arg9[%c0_10, %c0_11] : memref<8x16xf32, #tpu.memory_space<vmem>>, vector<8x16xf32>
      %20 = arith.addf %19, %9 : vector<8x16xf32>
      %c0_12 = arith.constant 0 : index
      %c0_13 = arith.constant 0 : index
      %21 = vector.load %arg9[%c0_12, %c0_13] : memref<8x16xf32, #tpu.memory_space<vmem>>, vector<8x16xf32>
      tpu.vector_store %arg9[%c0_12, %c0_13], %20 {strides = array<i32>} : memref<8x16xf32, #tpu.memory_space<vmem>>, vector<8x16xf32>,
    } else {
    }
    %c0_i32_8 = arith.constant 0 : i32
    %16 = arith.cmpi eq, %arg1, %c0_i32_8 : i32
    %17 = arith.extui %16 : i1 to i32
    %c0_i32_9 = arith.constant 0 : i32
    %18 = arith.cmpi ne, %17, %c0_i32_9 : i32
    scf.if %18 {
      %c0_10 = arith.constant 0 : index
      %c0_11 = arith.constant 0 : index
      %19 = vector.load %arg9[%c0_10, %c0_11] : memref<8x16xf32, #tpu.memory_space<vmem>>, vector<8x16xf32>
      %20 = vector.shape_cast %19 : vector<8x16xf32> to vector<1x8x16xf32>
      %cst_12 = arith.constant dense<0.000000e+00> : vector<1xf32>
      %21 = vector.multi_reduction <add>, %20, %cst_12 [1, 2] : vector<1x8x16xf32> to vector<1xf32>
      %22 = vector.shape_cast %21 : vector<1xf32> to vector<1x1x1xf32>
      %23 = vector.extract %22[0, 0, 0] : f32 from vector<1x1x1xf32>
      %c0_13 = arith.constant 0 : index
      %c0_14 = arith.constant 0 : index
      %24 = vector.load %arg5[%c0_13, %c0_14] : memref<2x16xf32, #tpu.memory_space<vmem>>, vector<2x16xf32>
      %c0_15 = arith.constant 0 : index
      %c0_16 = arith.constant 0 : index
      %25 = vector.load %arg6[%c0_15, %c0_16] : memref<2x16xf32, #tpu.memory_space<vmem>>, vector<2x16xf32>
      %cst_17 = arith.constant 0.000000e+00 : f32
      %26 = vector.broadcast %cst_17 : f32 to vector<2x16xf32>
      %27 = arith.maximumf %24, %26 : vector<2x16xf32>
      %28 = math.absf %24 : vector<2x16xf32>
      %cst_18 = arith.constant 0.000000e+00 : f32
      %29 = vector.broadcast %cst_18 : f32 to vector<2x16xf32>
      %30 = arith.subf %29, %28 : vector<2x16xf32>
      %31 = math.exp %30 : vector<2x16xf32>
      %32 = math.log1p %31 : vector<2x16xf32>
      %33 = arith.addf %27, %32 : vector<2x16xf32>
      %34 = arith.subf %33, %24 : vector<2x16xf32>
      %cst_19 = arith.constant 1.000000e+01 : f32
      %35 = vector.broadcast %cst_19 : f32 to vector<2x16xf32>
      %36 = arith.mulf %35, %25 : vector<2x16xf32>
      %37 = arith.mulf %36, %34 : vector<2x16xf32>
      %cst_20 = arith.constant 1.000000e+00 : f32
      %38 = vector.broadcast %cst_20 : f32 to vector<2x16xf32>
      %39 = arith.subf %38, %25 : vector<2x16xf32>
      %40 = arith.mulf %39, %33 : vector<2x16xf32>
      %41 = arith.addf %37, %40 : vector<2x16xf32>
      %42 = vector.shape_cast %41 : vector<2x16xf32> to vector<1x2x16xf32>
      %cst_21 = arith.constant dense<0.000000e+00> : vector<1xf32>
      %43 = vector.multi_reduction <add>, %42, %cst_21 [1, 2] : vector<1x2x16xf32> to vector<1xf32>
      %44 = vector.shape_cast %43 : vector<1xf32> to vector<1x1x1xf32>
      %45 = vector.extract %44[0, 0, 0] : f32 from vector<1x1x1xf32>
      %46 = vector.broadcast %23 : f32 to vector<1x8x128xf32>
      %c0_22 = arith.constant 0 : index
      %c0_23 = arith.constant 0 : index
      %c0_24 = arith.constant 0 : index
      %47 = vector.load %arg7[%c0_22, %c0_23, %c0_24] : memref<1x8x128xf32, #tpu.memory_space<vmem>>, vector<1x8x128xf32>
      tpu.vector_store %arg7[%c0_22, %c0_23, %c0_24], %46 {strides = array<i32>} : memref<1x8x128xf32, #tpu.memory_space<vmem>>, vector<1x8x128xf32>,
      %48 = vector.broadcast %45 : f32 to vector<1x8x128xf32>
      %c0_25 = arith.constant 0 : index
      %c0_26 = arith.constant 0 : index
      %c0_27 = arith.constant 0 : index
      %49 = vector.load %arg8[%c0_25, %c0_26, %c0_27] : memref<1x8x128xf32, #tpu.memory_space<vmem>>, vector<1x8x128xf32>
      tpu.vector_store %arg8[%c0_25, %c0_26, %c0_27], %48 {strides = array<i32>} : memref<1x8x128xf32, #tpu.memory_space<vmem>>, vector<1x8x128xf32>,
    } else {
    }
    return
  }
  func.func @transform_0(%arg0: i32, %arg1: i32) -> (i32, i32) {
    %c1_i32 = arith.constant 1 : i32
    %0 = arith.muli %arg0, %c1_i32 : i32
    %1 = arith.addi %0, %arg1 : i32
    %c0_i32 = arith.constant 0 : i32
    %2 = arith.minsi %1, %c0_i32 : i32
    %c0_i32_0 = arith.constant 0 : i32
    %c0_i32_1 = arith.constant 0 : i32
    return %2, %c0_i32_0 : i32, i32
  }
  func.func @transform_1(%arg0: i32, %arg1: i32) -> (i32, i32) {
    %c1_i32 = arith.constant 1 : i32
    %0 = arith.muli %arg0, %c1_i32 : i32
    %1 = arith.addi %0, %arg1 : i32
    %c0_i32 = arith.constant 0 : i32
    %2 = arith.minsi %1, %c0_i32 : i32
    %c0_i32_0 = arith.constant 0 : i32
    %c0_i32_1 = arith.constant 0 : i32
    return %2, %c0_i32_0 : i32, i32
  }
  func.func @transform_2(%arg0: i32, %arg1: i32) -> (i32, i32) {
    %c1_i32 = arith.constant 1 : i32
    %0 = arith.muli %arg0, %c1_i32 : i32
    %1 = arith.addi %0, %arg1 : i32
    %c0_i32 = arith.constant 0 : i32
    %2 = arith.minsi %1, %c0_i32 : i32
    %c0_i32_0 = arith.constant 0 : i32
    %c0_i32_1 = arith.constant 0 : i32
    return %2, %c0_i32_0 : i32, i32
  }
  func.func @transform_3(%arg0: i32, %arg1: i32) -> (i32, i32) {
    %c0_i32 = arith.constant 0 : i32
    %c0_i32_0 = arith.constant 0 : i32
    %c0_i32_1 = arith.constant 0 : i32
    return %c0_i32, %c0_i32_0 : i32, i32
  }
  func.func @transform_4(%arg0: i32, %arg1: i32) -> (i32, i32) {
    %c0_i32 = arith.constant 0 : i32
    %c0_i32_0 = arith.constant 0 : i32
    %c0_i32_1 = arith.constant 0 : i32
    return %c0_i32, %c0_i32_0 : i32, i32
  }
  func.func @transform_5(%arg0: i32, %arg1: i32) -> (i32, i32, i32) {
    %c0_i32 = arith.constant 0 : i32
    %c0_i32_0 = arith.constant 0 : i32
    %c0_i32_1 = arith.constant 0 : i32
    return %arg0, %c0_i32, %c0_i32_0 : i32, i32, i32
  }
  func.func @transform_6(%arg0: i32, %arg1: i32) -> (i32, i32, i32) {
    %c0_i32 = arith.constant 0 : i32
    %c0_i32_0 = arith.constant 0 : i32
    %c0_i32_1 = arith.constant 0 : i32
    return %arg0, %c0_i32, %c0_i32_0 : i32, i32, i32
  }
}

</mosaic_0001>

<llo_original>
// kernel: tpu_custom_call.1
$region0: #{tpu_custom_call.1}
  #allocation0 [shape = 'u32[]', space=smem, size = 0x4, offset = 0x4, fixed_abs, tag = 'smem constant byte address 0x4 - core index']
  #allocation1 [shape = 'u32[144,128]{1,0:T(1,128)}', space=vmem, size = 0x12000, scoped, tag = 'internal scratch']
  #allocation2 [shape = 'f32[8,16]{1,0:T(8,128)}', space=vmem, size = 0x1000, scoped, tag = 'scratch operand']
  %s0 = inlined_call_operand.hbm [shape: f32[16,16], index: 0, kind: input, shape index: {}]
  %s1 = inlined_call_operand.hbm [shape: f32[16,16], index: 1, kind: input, shape index: {}]
  %s2 = inlined_call_operand.hbm [shape: f32[16,16], index: 2, kind: input, shape index: {}]
  %s3 = inlined_call_operand.vmem [shape: f32[2,16], index: 3, kind: input, shape index: {}]
  %s4 = inlined_call_operand.vmem [shape: f32[2,16], index: 4, kind: input, shape index: {}]
  %s5 = inlined_call_operand.hbm [shape: f32[1,8,128], index: 5, kind: output, shape index: {0}]
  %s6 = inlined_call_operand.hbm [shape: f32[1,8,128], index: 6, kind: output, shape index: {1}]
  %7 = xla_tuple %s5, %s6
  %s8 = sld [smem:[#allocation0]]
  $region62: #{tpu_custom_call.1} parent=0
    _
  %s10 = ssub.s32 1, %s8
  %s11 = scalar_select 0, %s10, %s8
  $region1: #{tpu_custom_call.1} parent=0
    #allocation3 [shape = 'u8[8192]{0}', space=vmem, size = 0x2000, scoped, tag = 'input window, operand 0, single buffered']
    #allocation4 [shape = 's32[1]{0}', space=sflag, size = 0x4, scoped, tag = 'scoped memory for tpu_custom_call.1']
    #allocation5 [shape = 's32[1]{0}', space=sflag, size = 0x4, scoped, tag = 'scoped memory for tpu_custom_call.1']
    #allocation6 [shape = 'u8[8192]{0}', space=vmem, size = 0x2000, scoped, tag = 'input window, operand 1, single buffered']
    #allocation7 [shape = 's32[1]{0}', space=sflag, size = 0x4, scoped, tag = 'scoped memory for tpu_custom_call.1']
    #allocation8 [shape = 'u8[8192]{0}', space=vmem, size = 0x2000, scoped, tag = 'input window, operand 2, single buffered']
    #allocation9 [shape = 'u8[4096]{0}', space=vmem, size = 0x1000, scoped, tag = 'output window, operand 0, single buffered']
    #allocation10 [shape = 'u8[4096]{0}', space=vmem, size = 0x1000, scoped, tag = 'output window, operand 1, single buffered']
    #allocation11 [shape = 's32[1]{0}', space=sflag, size = 0x4, scoped, tag = 'scoped memory for tpu_custom_call.1']
    %12 = vsyncpa [#allocation4], 0
    %13 = vsyncpa [#allocation7], 0
    %14 = vsyncpa [#allocation5], 0
    %15 = vsyncpa [#allocation11], 0
    // Predicated region
    $region2: #{tpu_custom_call.1} parent=1 // pred_check
      _
    $region3: #{tpu_custom_call.1} parent=1 // pred_check_branch
      %17 = sbr.rel (0) target = $region5
    $region4: #{tpu_custom_call.1} parent=1 // pred_region
      %s18 = sadd.s32 0, 0
      %p19 = scmp.lt.s32.totalorder %s18, 0
      %s20 = scalar_select %p19, %s18, 0
      %s21 = smul.u32 2, %s20
      %s23 = ssub.s32 256, 256
      %24 = vsyncadd [#allocation4], %s23
      %s25 = smul.addr %s21, 128
      %s26 = scalar_lea.hbm %s0, %s25
      %s27 = sshll.u32 [#allocation3], 4
      %s28 = int_to_ptr.vmem [resolvable:$true] %s27
      %33 = dma.hbm_to_vmem [thread:$0]  %s26, 256, %s28, [#allocation4], 128, 128, 8
    $region5: #{tpu_custom_call.1} parent=1 // pred_fallthru
      _
    // Predicated region
    $region6: #{tpu_custom_call.1} parent=1 // pred_check
      _
    $region7: #{tpu_custom_call.1} parent=1 // pred_check_branch
      %35 = sbr.rel (0) target = $region9
    $region8: #{tpu_custom_call.1} parent=1 // pred_region
      %s36 = sadd.s32 0, 0
      %p37 = scmp.lt.s32.totalorder %s36, 0
      %s38 = scalar_select %p37, %s36, 0
      %s39 = smul.u32 2, %s38
      %s41 = ssub.s32 256, 256
      %42 = vsyncadd [#allocation7], %s41
      %s43 = smul.addr %s39, 128
      %s44 = scalar_lea.hbm %s1, %s43
      %s45 = sshll.u32 [#allocation6], 4
      %s46 = int_to_ptr.vmem [resolvable:$true] %s45
      %51 = dma.hbm_to_vmem [thread:$0]  %s44, 256, %s46, [#allocation7], 128, 128, 8
    $region9: #{tpu_custom_call.1} parent=1 // pred_fallthru
      _
    // Predicated region
    $region10: #{tpu_custom_call.1} parent=1 // pred_check
      _
    $region11: #{tpu_custom_call.1} parent=1 // pred_check_branch
      %53 = sbr.rel (0) target = $region13
    $region12: #{tpu_custom_call.1} parent=1 // pred_region
      %s54 = sadd.s32 0, 0
      %p55 = scmp.lt.s32.totalorder %s54, 0
      %s56 = scalar_select %p55, %s54, 0
      %s57 = smul.u32 2, %s56
      %s59 = ssub.s32 256, 256
      %60 = vsyncadd [#allocation7], %s59
      %s61 = smul.addr %s57, 128
      %s62 = scalar_lea.hbm %s2, %s61
      %s63 = sshll.u32 [#allocation8], 4
      %s64 = int_to_ptr.vmem [resolvable:$true] %s63
      %69 = dma.hbm_to_vmem [thread:$0]  %s62, 256, %s64, [#allocation7], 128, 128, 8
    $region13: #{tpu_custom_call.1} parent=1 // pred_fallthru
      _
    // Predicated region
    $region14: #{tpu_custom_call.1} parent=1 // pred_check
      _
    $region15: #{tpu_custom_call.1} parent=1 // pred_check_branch
      %71 = sbr.rel (0) target = $region17
    $region16: #{tpu_custom_call.1} parent=1 // pred_region
      _
    $region17: #{tpu_custom_call.1} parent=1 // pred_fallthru
      _
    // Predicated region
    $region18: #{tpu_custom_call.1} parent=1 // pred_check
      _
    $region19: #{tpu_custom_call.1} parent=1 // pred_check_branch
      %73 = sbr.rel (0) target = $region21
    $region20: #{tpu_custom_call.1} parent=1 // pred_region
      _
    $region21: #{tpu_custom_call.1} parent=1 // pred_fallthru
      _
    // Predicated region
    $region22: #{tpu_custom_call.1} parent=1 // pred_check
      _
    $region23: #{tpu_custom_call.1} parent=1 // pred_check_branch
      %75 = sbr.rel (0) target = $region25
    $region24: #{tpu_custom_call.1} parent=1 // pred_region
      %76 = dma.done [#allocation4], 256
    $region25: #{tpu_custom_call.1} parent=1 // pred_fallthru
      _
    // Predicated region
    $region26: #{tpu_custom_call.1} parent=1 // pred_check
      _
    $region27: #{tpu_custom_call.1} parent=1 // pred_check_branch
      %78 = sbr.rel (0) target = $region29
    $region28: #{tpu_custom_call.1} parent=1 // pred_region
      %79 = dma.done [#allocation7], 256
    $region29: #{tpu_custom_call.1} parent=1 // pred_fallthru
      _
    // Predicated region
    $region30: #{tpu_custom_call.1} parent=1 // pred_check
      _
    $region31: #{tpu_custom_call.1} parent=1 // pred_check_branch
      %81 = sbr.rel (0) target = $region33
    $region32: #{tpu_custom_call.1} parent=1 // pred_region
      %82 = dma.done [#allocation7], 256
    $region33: #{tpu_custom_call.1} parent=1 // pred_fallthru
      _
    %s83 = sadd.s32 0, 0
    %p84 = scmp.lt.s32.totalorder %s83, 0
    %s85 = scalar_select %p84, %s83, 0
    %s86 = smul.u32 2, %s85
    %s87 = sadd.s32 0, 0
    %p88 = scmp.lt.s32.totalorder %s87, 0
    %s89 = scalar_select %p88, %s87, 0
    %s90 = smul.u32 2, %s89
    %s91 = sadd.s32 0, 0
    %p92 = scmp.lt.s32.totalorder %s91, 0
    %s93 = scalar_select %p92, %s91, 0
    %s94 = smul.u32 2, %s93
    %v95 = vld [vmem:[#allocation8] sm:$0xff]
    %v96 = vld [vmem:[#allocation8 + $0x8] sm:$0xff]
    %v97 = vld [vmem:[#allocation3] sm:$0xff]
    %v98 = vld [vmem:[#allocation3 + $0x8] sm:$0xff]
    %v99 = vsub.f32 %v97, %v95
    %v100 = vsub.f32 %v98, %v96
    %v101 = vld [vmem:[#allocation6] sm:$0xff]
    %v102 = vld [vmem:[#allocation6 + $0x8] sm:$0xff]
    %v103 = vsub.f32 %v101, %v95
    %v104 = vsub.f32 %v102, %v96
    %v105 = vmul.f32 %v99, %v99
    %v106 = vmul.f32 %v100, %v100
    %v107 = vmul.f32 %v103, %v103
    %v108 = vmul.f32 %v104, %v104
    %v109 = vadd.f32 %v105, %v107
    %v110 = vadd.f32 %v106, %v108
    %vm111 = vcmask 130048
    %v112 = vsel %vm111, %v109, 0.0
    %v113 = vsel %vm111, %v110, 0.0
    %v114 = vadd.f32 %v112, %v113
    %p115 = scmp.eq.s32.totalorder 0, 0
    // Predicated region
    $region34: #{tpu_custom_call.1} parent=1 // pred_check
      %p116 = pneg %p115
    $region35: #{tpu_custom_call.1} parent=1 // pred_check_branch
      %118 = sbr.rel (%p116) target = $region37
    $region36: #{tpu_custom_call.1} parent=1 // pred_region
      %119 = vst.msk [vmem:[#allocation2] sm:$0xff] %vm111, %v114
    $region37: #{tpu_custom_call.1} parent=1 // pred_fallthru
      _
    %p120 = scmp.gt.s32.totalorder 0, 0
    // Predicated region
    $region38: #{tpu_custom_call.1} parent=1 // pred_check
      %p121 = pneg %p120
    $region39: #{tpu_custom_call.1} parent=1 // pred_check_branch
      %123 = sbr.rel (%p121) target = $region41
    $region40: #{tpu_custom_call.1} parent=1 // pred_region
      %v124 = vld [vmem:[#allocation2] sm:$0xff]
      %v125 = vadd.f32 %v124, %v114
      %126 = vst.msk [vmem:[#allocation2] sm:$0xff] %vm111, %v125
    $region41: #{tpu_custom_call.1} parent=1 // pred_fallthru
      _
    // Predicated region
    $region42: #{tpu_custom_call.1} parent=1 // pred_check
      %p127 = pneg %p115
    $region43: #{tpu_custom_call.1} parent=1 // pred_check_branch
      %129 = sbr.rel (%p127) target = $region45
    $region44: #{tpu_custom_call.1} parent=1 // pred_region
      %v130 = vld [vmem:[#allocation2] sm:$0xff]
      %v131 = vsel %vm111, %v130, 0.0
      %132 = vadd.xlane.f32.xlu0 %v131
      %v133 = vpop.xlane.xlu0 %132
      %v134 = vrot.slane %v133, 4
      %v135 = vadd.f32 %v133, %v134
      %v136 = vrot.slane %v135, 2
      %v137 = vadd.f32 %v135, %v136
      %v138 = vrot.slane %v137, 1
      %v139 = vadd.f32 %v137, %v138
      %s140 = vtos %v139
      %v141 = vld [vmem:[%s3] sm:$0x3]
      %v142 = vld [vmem:[%s4] sm:$0x3]
      %v143 = vmax.f32 %v141, 0.0
      %v144 = vand.u32 2147483647, %v141
      %v145 = vsub.f32 0.0, %v144
      %v146 = vmul.f32 %v145, 1.442695
      %v147 = vpow.pop %v146
      %v148 = vadd.f32 %v147, 1.0
      %v149 = vlog2.pop %v148
      %v150 = vmul.f32 %v149, 0.6931472
      %v151 = vmul.f32 -0.5, %v147
      %v152 = vadd.f32 %v151, 1.0
      %v153 = vmul.f32 %v152, %v147
      %v154 = vand.u32 2147483647, %v147
      %vm155 = vcmp.lt.f32.partialorder %v154, 0.0004427343
      %v156 = vsel %vm155, %v153, %v150
      %v157 = vadd.f32 %v143, %v156
      %v158 = vsub.f32 %v157, %v141
      %v159 = vmul.f32 %v142, 10.0
      %v160 = vmul.f32 %v159, %v158
      %v161 = vsub.f32 1.0, %v142
      %v162 = vmul.f32 %v161, %v157
      %v163 = vadd.f32 %v160, %v162
      %vm164 = vcmask 123904
      %v165 = vsel %vm164, %v163, 0.0
      %166 = vadd.xlane.f32.xlu0 %v165
      %v167 = vpop.xlane.xlu0 %166
      %v168 = vrot.slane %v167, 4
      %v169 = vadd.f32 %v167, %v168
      %v170 = vrot.slane %v169, 2
      %v171 = vadd.f32 %v169, %v170
      %v172 = vrot.slane %v171, 1
      %v173 = vadd.f32 %v171, %v172
      %s174 = vtos %v173
      %v175 = vstv %s140
      %176 = vst [vmem:[#allocation9] sm:$0xff] %v175
      %v177 = vstv %s174
      %178 = vst [vmem:[#allocation10] sm:$0xff] %v177
    $region45: #{tpu_custom_call.1} parent=1 // pred_fallthru
      _
    // Predicated region
    $region46: #{tpu_custom_call.1} parent=1 // pred_check
      _
    $region47: #{tpu_custom_call.1} parent=1 // pred_check_branch
      %180 = sbr.rel (0) target = $region49
    $region48: #{tpu_custom_call.1} parent=1 // pred_region
      %s182 = ssub.s32 128, 128
      %183 = vsyncadd [#allocation5], %s182
      %s185 = sshll.u32 [#allocation9], 4
      %s186 = int_to_ptr.vmem [resolvable:$true] %s185
      %188 = dma.vmem_to_hbm [thread:$0]  %s186, 128, %s5, [#allocation5]
    $region49: #{tpu_custom_call.1} parent=1 // pred_fallthru
      _
    // Predicated region
    $region50: #{tpu_custom_call.1} parent=1 // pred_check
      _
    $region51: #{tpu_custom_call.1} parent=1 // pred_check_branch
      %190 = sbr.rel (0) target = $region53
    $region52: #{tpu_custom_call.1} parent=1 // pred_region
      %s192 = ssub.s32 128, 128
      %193 = vsyncadd [#allocation11], %s192
      %s195 = sshll.u32 [#allocation10], 4
      %s196 = int_to_ptr.vmem [resolvable:$true] %s195
      %198 = dma.vmem_to_hbm [thread:$0]  %s196, 128, %s6, [#allocation11]
    $region53: #{tpu_custom_call.1} parent=1 // pred_fallthru
      _
    // Predicated region
    $region54: #{tpu_custom_call.1} parent=1 // pred_check
      _
    $region55: #{tpu_custom_call.1} parent=1 // pred_check_branch
      %200 = sbr.rel (0) target = $region57
    $region56: #{tpu_custom_call.1} parent=1 // pred_region
      %201 = dma.done [#allocation5], 128
    $region57: #{tpu_custom_call.1} parent=1 // pred_fallthru
      _
    // Predicated region
    $region58: #{tpu_custom_call.1} parent=1 // pred_check
      _
    $region59: #{tpu_custom_call.1} parent=1 // pred_check_branch
      %203 = sbr.rel (0) target = $region61
    $region60: #{tpu_custom_call.1} parent=1 // pred_region
      %204 = dma.done [#allocation11], 128
    $region61: #{tpu_custom_call.1} parent=1 // pred_fallthru
      _
    %205 = vsyncpa [#allocation4], 1
    %206 = vsyncpa [#allocation7], 1
    %207 = vsyncpa [#allocation5], 1
    %208 = vsyncpa [#allocation11], 1

</llo_original>
